<compile_context>
chip_gen: v7x
topology: tpu7x:2x2x1
jax: 0.10.0
libtpu: 0.0.40
codegen_flags: <defaults>
</compile_context>

<pallas_src>
import functools

import jax
import jax.numpy as jnp
from jax import lax
from jax.experimental import pallas as pl
from jax.experimental.pallas import tpu as pltpu


def _round_up(x, m):
    return (x + m - 1) // m * m


def _contrastive_kernel(img_ref, cap_ref, intra_ref, inter_ref, max_acc,
                        *, margin, n_valid, n_pad, tm, tn, use_bf16):
    i = pl.program_id(0)          # img-row block   ("parallel")
    j = pl.program_id(1)          # cap-row block   ("arbitrary" / reduction)

    # Reset the running row-max at the start of every cap sweep.
    @pl.when(j == 0)
    def _():
        max_acc[...] = jnp.zeros_like(max_acc)

    img = img_ref[...].astype(jnp.float32)       # (TM, Dp)
    cap = cap_ref[...].astype(jnp.float32)       # (TN, Dp)

    # F.normalize: x / max(||x||_2, eps)  ==  x * rsqrt(max(||x||^2, eps^2)).
    eps = 1e-12
    img_n = img * lax.rsqrt(
        jnp.maximum(jnp.sum(img * img, axis=1, keepdims=True), eps * eps))
    cap_n = cap * lax.rsqrt(
        jnp.maximum(jnp.sum(cap * cap, axis=1, keepdims=True), eps * eps))

    # Pairwise squared distance of unit vectors: ||a - b||^2 = 2 - 2<a, b>.
    # TODO(synk): assumes no *real* input row has norm < eps (all-zero rows);
    # zero-padded rows are handled by the padded-column mask below.
    if use_bf16:
        lhs = img_n.astype(jnp.bfloat16)
        rhs = cap_n.astype(jnp.bfloat16)
    else:
        lhs, rhs = img_n, cap_n
    dot = lax.dot_general(lhs, rhs,
                          dimension_numbers=(((1,), (1,)), ((), ())),
                          preferred_element_type=jnp.float32)    # (TM, TN)
    dist = jnp.maximum(2.0 - 2.0 * dot, 0.0)

    hinge = jnp.maximum(margin - dist, 0.0)

    # Mask diagonal entries (only possible in the i == j block, since tm == tn)
    # and padded cap columns.  hinge >= 0, so masking to 0 with a 0-initialized
    # accumulator matches the reference's off-diagonal row max (N > 1).
    local_diag = (lax.broadcasted_iota(jnp.int32, (tm, tn), 0) ==
                  lax.broadcasted_iota(jnp.int32, (tm, tn), 1))
    mask = jnp.logical_and(i == j, local_diag)
    if n_pad > n_valid:   # static: only emit the column mask if padding exists
        col = j * tn + lax.broadcasted_iota(jnp.int32, (tm, tn), 1)
        mask = jnp.logical_or(mask, col >= n_valid)
    hinge = jnp.where(mask, 0.0, hinge)

    max_acc[...] = jnp.maximum(max_acc[...], jnp.max(hinge, axis=1)[None, :])

    # Diagonal tile: intra = ||img_n[r] - cap_n[r]||^2, computed directly in
    # f32 (exactly 0 for identical rows; no NxN masks needed).
    @pl.when(i == j)
    def _():
        diff = img_n - cap_n
        intra_ref[...] = jnp.sum(diff * diff, axis=1)[None, :]

    @pl.when(j == pl.num_programs(1) - 1)
    def _():
        inter_ref[...] = max_acc[...]


def contrastive_loss(img_feature, cap_feature, margin=0.5, *,
                     block_rows=256, use_bf16_matmul=True):
    """Pallas implementation of ContrastiveLoss.forward.

    Args:
      img_feature: (N, D) float array.
      cap_feature: (N, D) float array.
      margin: python float, hinge margin.
      block_rows: row-tile size target (rounded up to a multiple of 128 when
        the batch is tiled; a single tile is used when N <= block_rows).
      use_bf16_matmul: cast normalized tiles to bf16 for the MXU dot
        (f32 accumulate). ~3 decimal digits of accuracy on the distances.

    Returns:
      dict with 'intra' (N,) and 'inter' (N,) float32 arrays.
    """
    n, d = img_feature.shape
    assert cap_feature.shape == (n, d)

    # Row tile: single block for small batches, otherwise a multiple of 128
    # so outputs are lane-dense (unmasked vst) and MXU M/N are filled.
    if n <= block_rows:
        tm = _round_up(n, 8)
    else:
        tm = _round_up(block_rows, 128)
    tn = tm                       # equal tiles => diagonal lives in block i == j
    n_pad = _round_up(n, tm)
    d_pad = _round_up(d, 128)     # MXU contraction depth / lane density

    def _pad(x):
        x = x.astype(jnp.float32)
        return jnp.pad(x, ((0, n_pad - n), (0, d_pad - d)))

    img_p = _pad(img_feature)
    cap_p = _pad(cap_feature)

    kernel = functools.partial(
        _contrastive_kernel, margin=float(margin), n_valid=n, n_pad=n_pad,
        tm=tm, tn=tn, use_bf16=use_bf16_matmul)

    grid = (n_pad // tm, n_pad // tn)

    intra, inter = pl.pallas_call(
        kernel,
        out_shape=(
            jax.ShapeDtypeStruct((1, n_pad), jnp.float32),
            jax.ShapeDtypeStruct((1, n_pad), jnp.float32),
        ),
        grid=grid,
        in_specs=[
            pl.BlockSpec((tm, d_pad), lambda i, j: (i, 0)),   # img rows: per i (held over j)
            pl.BlockSpec((tn, d_pad), lambda i, j: (j, 0)),   # cap rows: streamed over j
        ],
        out_specs=(
            pl.BlockSpec((1, tm), lambda i, j: (0, i)),       # resident across j
            pl.BlockSpec((1, tm), lambda i, j: (0, i)),
        ),
        scratch_shapes=[pltpu.VMEM((1, tm), jnp.float32)],    # running row-max
        compiler_params=pltpu.CompilerParams(
            dimension_semantics=("parallel", "arbitrary")),
    )(img_p, cap_p)

    return {"intra": intra[0, :n], "inter": inter[0, :n]}


def _reference(img_feature, cap_feature, margin=0.5):
    """Pure-JAX reference mirroring the PyTorch module (f32)."""
    eps = 1e-12
    img_n = img_feature / jnp.maximum(
        jnp.linalg.norm(img_feature, axis=1, keepdims=True), eps)
    cap_n = cap_feature / jnp.maximum(
        jnp.linalg.norm(cap_feature, axis=1, keepdims=True), eps)
    dist = jnp.sum((img_n[:, None, :] - cap_n[None, :, :]) ** 2, axis=2)
    n = dist.shape[0]
    eye = jnp.eye(n, dtype=bool)
    intra = jnp.diagonal(dist)
    # clamp >= 0, so masking the diagonal to 0 equals dropping it (N > 1).
    off = jnp.where(eye, 0.0, jnp.clip(margin - dist, 0.0, None))
    inter = jnp.max(off, axis=1)
    return {"intra": intra, "inter": inter}


if __name__ == "__main__":
    key = jax.random.PRNGKey(0)
    k1, k2, k3, k4 = jax.random.split(key, 4)

    # Small shapes consistent with the module: batch=8 pairs, hidden=32.
    N, D = 8, 32
    img = jax.random.normal(k1, (N, D), dtype=jnp.float32)
    cap = jax.random.normal(k2, (N, D), dtype=jnp.float32)

    out = contrastive_loss(img, cap, margin=0.5)
    jax.block_until_ready(out)
    ref = _reference(img, cap, margin=0.5)
    assert jnp.allclose(out["intra"], ref["intra"], atol=1e-4, rtol=1e-4)
    # inter goes through the bf16 MXU dot -> loosened tolerance.
    assert jnp.allclose(out["inter"], ref["inter"], atol=2e-2, rtol=2e-2)

    # Second case exercising the tiled grid + row/feature padding paths.
    N2, D2 = 300, 96
    img2 = jax.random.normal(k3, (N2, D2), dtype=jnp.float32)
    cap2 = jax.random.normal(k4, (N2, D2), dtype=jnp.float32)
    out2 = contrastive_loss(img2, cap2, margin=0.5, block_rows=128)
    jax.block_until_ready(out2)
    ref2 = _reference(img2, cap2, margin=0.5)
    assert jnp.allclose(out2["intra"], ref2["intra"], atol=1e-4, rtol=1e-4)
    assert jnp.allclose(out2["inter"], ref2["inter"], atol=2e-2, rtol=2e-2)

    print("KERNEL_OK")
</pallas_src>

<mosaic_0001>
module attributes {stable_mosaic.version = 11 : i64} {
  func.func @_contrastive_kernel(%arg0: i32, %arg1: i32, %arg2: memref<8x128xf32, #tpu.memory_space<vmem>>, %arg3: memref<8x128xf32, #tpu.memory_space<vmem>>, %arg4: memref<1x8xf32, #tpu.memory_space<vmem>>, %arg5: memref<1x8xf32, #tpu.memory_space<vmem>>, %arg6: memref<1x8xf32, #tpu.memory_space<vmem>>) attributes {dimension_semantics = [#tpu.dimension_semantics<parallel>, #tpu.dimension_semantics<arbitrary>], iteration_bounds = array<i64: 1, 1>, scalar_prefetch = 0 : i64, scratch_operands = 1 : i64, tpu.core_type = #tpu.core_type<tc>, window_params = [{transform_indices = @transform_0, window_bounds = array<i64: 8, 128>}, {transform_indices = @transform_1, window_bounds = array<i64: 8, 128>}, {transform_indices = @transform_2, window_bounds = array<i64: 1, 8>}, {transform_indices = @transform_3, window_bounds = array<i64: 1, 8>}]} {
    %c0_i32 = arith.constant 0 : i32
    %0 = arith.cmpi eq, %arg1, %c0_i32 : i32
    %1 = arith.extui %0 : i1 to i32
    %c0_i32_0 = arith.constant 0 : i32
    %2 = arith.cmpi ne, %1, %c0_i32_0 : i32
    scf.if %2 {
      %cst_22 = arith.constant 0.000000e+00 : f32
      %53 = vector.broadcast %cst_22 : f32 to vector<1x8xf32>
      %c0_23 = arith.constant 0 : index
      %c0_24 = arith.constant 0 : index
      %54 = vector.load %arg6[%c0_23, %c0_24] : memref<1x8xf32, #tpu.memory_space<vmem>>, vector<1x8xf32>
      tpu.vector_store %arg6[%c0_23, %c0_24], %53 {strides = array<i32>} : memref<1x8xf32, #tpu.memory_space<vmem>>, vector<1x8xf32>,
    } else {
    }
    %c0 = arith.constant 0 : index
    %c0_1 = arith.constant 0 : index
    %3 = vector.load %arg2[%c0, %c0_1] : memref<8x128xf32, #tpu.memory_space<vmem>>, vector<8x128xf32>
    %c0_2 = arith.constant 0 : index
    %c0_3 = arith.constant 0 : index
    %4 = vector.load %arg3[%c0_2, %c0_3] : memref<8x128xf32, #tpu.memory_space<vmem>>, vector<8x128xf32>
    %5 = arith.mulf %3, %3 : vector<8x128xf32>
    %cst = arith.constant dense<0.000000e+00> : vector<8xf32>
    %6 = vector.multi_reduction <add>, %5, %cst [1] : vector<8x128xf32> to vector<8xf32>
    %7 = vector.shape_cast %6 : vector<8xf32> to vector<8x1xf32>
    %cst_4 = arith.constant 1.000000e-24 : f32
    %8 = vector.broadcast %cst_4 : f32 to vector<8x1xf32>
    %9 = arith.maximumf %7, %8 : vector<8x1xf32>
    %10 = math.rsqrt %9 : vector<8x1xf32>
    %11 = vector.broadcast %10 : vector<8x1xf32> to vector<8x128xf32>
    %12 = arith.mulf %3, %11 : vector<8x128xf32>
    %13 = arith.mulf %4, %4 : vector<8x128xf32>
    %cst_5 = arith.constant dense<0.000000e+00> : vector<8xf32>
    %14 = vector.multi_reduction <add>, %13, %cst_5 [1] : vector<8x128xf32> to vector<8xf32>
    %15 = vector.shape_cast %14 : vector<8xf32> to vector<8x1xf32>
    %cst_6 = arith.constant 1.000000e-24 : f32
    %16 = vector.broadcast %cst_6 : f32 to vector<8x1xf32>
    %17 = arith.maximumf %15, %16 : vector<8x1xf32>
    %18 = math.rsqrt %17 : vector<8x1xf32>
    %19 = vector.broadcast %18 : vector<8x1xf32> to vector<8x128xf32>
    %20 = arith.mulf %4, %19 : vector<8x128xf32>
    %21 = arith.truncf %12 : vector<8x128xf32> to vector<8x128xbf16>
    %22 = arith.truncf %20 : vector<8x128xf32> to vector<8x128xbf16>
    %cst_7 = arith.constant dense<0.000000e+00> : vector<8x8xf32>
    %23 = tpu.matmul %21, %22, %cst_7 {dimension_numbers = #tpu.dot_dimension_numbers<[1], [1], [0], [0], [0, 0, 1, 0], [], []>} : vector<8x128xbf16>, vector<8x128xbf16>, vector<8x8xf32> -> vector<8x8xf32>
    %cst_8 = arith.constant 2.000000e+00 : f32
    %24 = vector.broadcast %cst_8 : f32 to vector<8x8xf32>
    %25 = arith.mulf %24, %23 : vector<8x8xf32>
    %cst_9 = arith.constant 2.000000e+00 : f32
    %26 = vector.broadcast %cst_9 : f32 to vector<8x8xf32>
    %27 = arith.subf %26, %25 : vector<8x8xf32>
    %cst_10 = arith.constant 0.000000e+00 : f32
    %28 = vector.broadcast %cst_10 : f32 to vector<8x8xf32>
    %29 = arith.maximumf %27, %28 : vector<8x8xf32>
    %cst_11 = arith.constant 5.000000e-01 : f32
    %30 = vector.broadcast %cst_11 : f32 to vector<8x8xf32>
    %31 = arith.subf %30, %29 : vector<8x8xf32>
    %cst_12 = arith.constant 0.000000e+00 : f32
    %32 = vector.broadcast %cst_12 : f32 to vector<8x8xf32>
    %33 = arith.maximumf %31, %32 : vector<8x8xf32>
    %34 = tpu.iota {dimensions = array<i32: 0>} : vector<8x8xi32>
    %35 = tpu.iota {dimensions = array<i32: 1>} : vector<8x8xi32>
    %36 = arith.cmpi eq, %34, %35 : vector<8x8xi32>
    %37 = arith.cmpi eq, %arg0, %arg1 : i32
    %38 = vector.broadcast %37 : i1 to vector<8x8xi1>
    %39 = arith.andi %38, %36 : vector<8x8xi1>
    %cst_13 = arith.constant 0.000000e+00 : f32
    %40 = vector.broadcast %cst_13 : f32 to vector<8x8xf32>
    %41 = arith.select %39, %40, %33 : vector<8x8xi1>, vector<8x8xf32>
    %c0_14 = arith.constant 0 : index
    %c0_15 = arith.constant 0 : index
    %42 = vector.load %arg6[%c0_14, %c0_15] : memref<1x8xf32, #tpu.memory_space<vmem>>, vector<1x8xf32>
    %cst_16 = arith.constant dense<0xFF800000> : vector<8xf32>
    %43 = vector.multi_reduction <maximumf>, %41, %cst_16 [1] : vector<8x8xf32> to vector<8xf32>
    %44 = vector.shape_cast %43 : vector<8xf32> to vector<1x8xf32>
    %45 = arith.maximumf %42, %44 : vector<1x8xf32>
    %c0_17 = arith.constant 0 : index
    %c0_18 = arith.constant 0 : index
    %46 = vector.load %arg6[%c0_17, %c0_18] : memref<1x8xf32, #tpu.memory_space<vmem>>, vector<1x8xf32>
    tpu.vector_store %arg6[%c0_17, %c0_18], %45 {strides = array<i32>} : memref<1x8xf32, #tpu.memory_space<vmem>>, vector<1x8xf32>,
    %47 = arith.cmpi eq, %arg0, %arg1 : i32
    %48 = arith.extui %47 : i1 to i32
    %c0_i32_19 = arith.constant 0 : i32
    %49 = arith.cmpi ne, %48, %c0_i32_19 : i32
    scf.if %49 {
      %53 = arith.subf %12, %20 : vector<8x128xf32>
      %54 = arith.mulf %53, %53 : vector<8x128xf32>
      %cst_22 = arith.constant dense<0.000000e+00> : vector<8xf32>
      %55 = vector.multi_reduction <add>, %54, %cst_22 [1] : vector<8x128xf32> to vector<8xf32>
      %56 = vector.shape_cast %55 : vector<8xf32> to vector<1x8xf32>
      %c0_23 = arith.constant 0 : index
      %c0_24 = arith.constant 0 : index
      %57 = vector.load %arg4[%c0_23, %c0_24] : memref<1x8xf32, #tpu.memory_space<vmem>>, vector<1x8xf32>
      tpu.vector_store %arg4[%c0_23, %c0_24], %56 {strides = array<i32>} : memref<1x8xf32, #tpu.memory_space<vmem>>, vector<1x8xf32>,
    } else {
    }
    %c0_i32_20 = arith.constant 0 : i32
    %50 = arith.cmpi eq, %arg1, %c0_i32_20 : i32
    %51 = arith.extui %50 : i1 to i32
    %c0_i32_21 = arith.constant 0 : i32
    %52 = arith.cmpi ne, %51, %c0_i32_21 : i32
    scf.if %52 {
      %c0_22 = arith.constant 0 : index
      %c0_23 = arith.constant 0 : index
      %53 = vector.load %arg6[%c0_22, %c0_23] : memref<1x8xf32, #tpu.memory_space<vmem>>, vector<1x8xf32>
      %c0_24 = arith.constant 0 : index
      %c0_25 = arith.constant 0 : index
      %54 = vector.load %arg5[%c0_24, %c0_25] : memref<1x8xf32, #tpu.memory_space<vmem>>, vector<1x8xf32>
      tpu.vector_store %arg5[%c0_24, %c0_25], %53 {strides = array<i32>} : memref<1x8xf32, #tpu.memory_space<vmem>>, vector<1x8xf32>,
    } else {
    }
    return
  }
  func.func @transform_0(%arg0: i32, %arg1: i32) -> (i32, i32) {
    %c0_i32 = arith.constant 0 : i32
    %c0_i32_0 = arith.constant 0 : i32
    return %arg0, %c0_i32 : i32, i32
  }
  func.func @transform_1(%arg0: i32, %arg1: i32) -> (i32, i32) {
    %c0_i32 = arith.constant 0 : i32
    %c0_i32_0 = arith.constant 0 : i32
    return %arg1, %c0_i32 : i32, i32
  }
  func.func @transform_2(%arg0: i32, %arg1: i32) -> (i32, i32) {
    %c0_i32 = arith.constant 0 : i32
    %c0_i32_0 = arith.constant 0 : i32
    return %c0_i32, %arg0 : i32, i32
  }
  func.func @transform_3(%arg0: i32, %arg1: i32) -> (i32, i32) {
    %c0_i32 = arith.constant 0 : i32
    %c0_i32_0 = arith.constant 0 : i32
    return %c0_i32, %arg0 : i32, i32
  }
}

</mosaic_0001>

<llo_original>
// kernel: tpu_custom_call.1
$region0: #{tpu_custom_call.1}
  #allocation0 [shape = 'u32[]', space=smem, size = 0x4, offset = 0x4, fixed_abs, tag = 'smem constant byte address 0x4 - core index']
  #allocation1 [shape = 'u32[144,128]{1,0:T(1,128)}', space=vmem, size = 0x12000, scoped, tag = 'internal scratch']
  #allocation2 [shape = 'f32[1,8]{1,0:T(1,128)}', space=vmem, size = 0x200, scoped, tag = 'scratch operand']
  %s0 = inlined_call_operand.hbm [shape: f32[8,128], index: 0, kind: input, shape index: {}]
  %s1 = inlined_call_operand.hbm [shape: f32[8,128], index: 1, kind: input, shape index: {}]
  %s2 = inlined_call_operand.hbm [shape: f32[1,8], index: 2, kind: output, shape index: {0}]
  %s3 = inlined_call_operand.hbm [shape: f32[1,8], index: 3, kind: output, shape index: {1}]
  %4 = xla_tuple %s2, %s3
  %s5 = sld [smem:[#allocation0]]
  $region46: #{tpu_custom_call.1} parent=0
    _
  %s7 = ssub.s32 1, %s5
  %s8 = scalar_select 0, %s7, %s5
  $region1: #{tpu_custom_call.1} parent=0
    #allocation3 [shape = 'u8[4096]{0}', space=vmem, size = 0x1000, scoped, tag = 'input window, operand 0, single buffered']
    #allocation4 [shape = 's32[1]{0}', space=sflag, size = 0x4, scoped, tag = 'scoped memory for tpu_custom_call.1']
    #allocation5 [shape = 's32[1]{0}', space=sflag, size = 0x4, scoped, tag = 'scoped memory for tpu_custom_call.1']
    #allocation6 [shape = 'u8[4096]{0}', space=vmem, size = 0x1000, scoped, tag = 'input window, operand 1, single buffered']
    #allocation7 [shape = 's32[1]{0}', space=sflag, size = 0x4, scoped, tag = 'scoped memory for tpu_custom_call.1']
    #allocation8 [shape = 'u8[512]{0}', space=vmem, size = 0x400, scoped, tag = 'output window, operand 0, single buffered']
    #allocation9 [shape = 'u8[512]{0}', space=vmem, size = 0x400, scoped, tag = 'output window, operand 1, single buffered']
    #allocation10 [shape = 's32[1]{0}', space=sflag, size = 0x4, scoped, tag = 'scoped memory for tpu_custom_call.1']
    %9 = vsyncpa [#allocation4], 0
    %10 = vsyncpa [#allocation7], 0
    %11 = vsyncpa [#allocation5], 0
    %12 = vsyncpa [#allocation10], 0
    // Predicated region
    $region2: #{tpu_custom_call.1} parent=1 // pred_check
      _
    $region3: #{tpu_custom_call.1} parent=1 // pred_check_branch
      %14 = sbr.rel (0) target = $region5
    $region4: #{tpu_custom_call.1} parent=1 // pred_region
      %s16 = ssub.s32 128, 128
      %17 = vsyncadd [#allocation4], %s16
      %s19 = sshll.u32 [#allocation3], 4
      %s20 = int_to_ptr.vmem [resolvable:$true] %s19
      %22 = dma.hbm_to_vmem [thread:$0]  %s0, 128, %s20, [#allocation4]
    $region5: #{tpu_custom_call.1} parent=1 // pred_fallthru
      _
    // Predicated region
    $region6: #{tpu_custom_call.1} parent=1 // pred_check
      _
    $region7: #{tpu_custom_call.1} parent=1 // pred_check_branch
      %24 = sbr.rel (0) target = $region9
    $region8: #{tpu_custom_call.1} parent=1 // pred_region
      %s26 = ssub.s32 128, 128
      %27 = vsyncadd [#allocation7], %s26
      %s29 = sshll.u32 [#allocation6], 4
      %s30 = int_to_ptr.vmem [resolvable:$true] %s29
      %32 = dma.hbm_to_vmem [thread:$0]  %s1, 128, %s30, [#allocation7]
    $region9: #{tpu_custom_call.1} parent=1 // pred_fallthru
      _
    // Predicated region
    $region10: #{tpu_custom_call.1} parent=1 // pred_check
      _
    $region11: #{tpu_custom_call.1} parent=1 // pred_check_branch
      %34 = sbr.rel (0) target = $region13
    $region12: #{tpu_custom_call.1} parent=1 // pred_region
      %35 = dma.done [#allocation4], 128
    $region13: #{tpu_custom_call.1} parent=1 // pred_fallthru
      _
    // Predicated region
    $region14: #{tpu_custom_call.1} parent=1 // pred_check
      _
    $region15: #{tpu_custom_call.1} parent=1 // pred_check_branch
      %37 = sbr.rel (0) target = $region17
    $region16: #{tpu_custom_call.1} parent=1 // pred_region
      %38 = dma.done [#allocation7], 128
    $region17: #{tpu_custom_call.1} parent=1 // pred_fallthru
      _
    %p40 = scmp.eq.s32.totalorder 0, 0
    // Predicated region
    $region18: #{tpu_custom_call.1} parent=1 // pred_check
      %p41 = pneg %p40
    $region19: #{tpu_custom_call.1} parent=1 // pred_check_branch
      %43 = sbr.rel (%p41) target = $region21
    $region20: #{tpu_custom_call.1} parent=1 // pred_region
      %vm44 = vcmask 57344
      %45 = vst.msk [vmem:[#allocation2] sm:$0x1] %vm44, 0.0
    $region21: #{tpu_custom_call.1} parent=1 // pred_fallthru
      _
    %v46 = vld [vmem:[#allocation3] sm:$0xff]
    %v47 = vld [vmem:[#allocation6] sm:$0xff]
    %v48 = vmul.f32 %v46, %v46
    %49 = vadd.xlane.f32.xlu0 %v48
    %v50 = vpop.xlane.xlu0 %49
    %v51 = vmax.f32 %v50, 1e-24
    %v52 = vrsqrt.pop %v51
    %v53 = vmul.f32 %v46, %v52
    %v54 = vmul.f32 %v47, %v47
    %55 = vadd.xlane.f32.xlu0 %v54
    %v56 = vpop.xlane.xlu0 %55
    %v57 = vmax.f32 %v56, 1e-24
    %v58 = vrsqrt.pop %v57
    %v59 = vmul.f32 %v47, %v58
    %v60 = vpack.c.bf16 %v53, %v53
    %v61 = vpack.c.bf16 %v59, %v59
    %62 = vmatprep.subr.bf16.mxu0 0
    %63 = vmatpush1.bf16.xpose.msra.mxu0 %v61
    %64 = vmatprep.subr.bf16.mxu0 0
    %65 = vmatpush1.bf16.xpose.msra.mxu0 0
    %66 = vmatprep.subr.bf16.mxu0 0
    %67 = vmatpush1.bf16.xpose.msra.mxu0 0
    %68 = vmatprep.subr.bf16.mxu0 0
    %69 = vmatpush1.bf16.xpose.msra.mxu0 0
    %70 = vmatprep.subr.bf16.mxu0 0
    %71 = vmatpush1.bf16.xpose.msra.mxu0 0
    %72 = vmatprep.subr.bf16.mxu0 0
    %73 = vmatpush1.bf16.xpose.msra.mxu0 0
    %74 = vmatprep.subr.bf16.mxu0 0
    %75 = vmatpush1.bf16.xpose.msra.mxu0 0
    %76 = vmatprep.subr.bf16.mxu0 0
    %77 = vmatpush1.bf16.xpose.msra.mxu0 0
    %78 = vmatprep.subr.bf16.mxu0 0
    %79 = vmatpush1.bf16.xpose.msra.mxu0 0
    %80 = vmatprep.subr.bf16.mxu0 0
    %81 = vmatpush1.bf16.xpose.msra.mxu0 0
    %82 = vmatprep.subr.bf16.mxu0 0
    %83 = vmatpush1.bf16.xpose.msra.mxu0 0
    %84 = vmatprep.subr.bf16.mxu0 0
    %85 = vmatpush1.bf16.xpose.msra.mxu0 0
    %86 = vmatprep.subr.bf16.mxu0 0
    %87 = vmatpush1.bf16.xpose.msra.mxu0 0
    %88 = vmatprep.subr.bf16.mxu0 0
    %89 = vmatpush1.bf16.xpose.msra.mxu0 0
    %90 = vmatprep.subr.bf16.mxu0 0
    %91 = vmatpush1.bf16.xpose.msra.mxu0 0
    %92 = vmatprep.subr.bf16.mxu0 0
    %93 = vmatpush1.bf16.xpose.msra.mxu0 0
    %94 = vmatprep.mubr.bf16.mxu0 0
    %95 = vmatmul.mubr.bf16.gmra.mrb[0].mxu0 %v60
    %v96 = vpop.f32.mrb[0].mxu0
    %v97 = vadd.f32 0.0, %v96
    %v98 = vpop.f32.mrb[0].mxu0
    %v99 = vpop.f32.mrb[0].mxu0
    %v100 = vpop.f32.mrb[0].mxu0
    %101 = vdwg.mxu0
    %v102 = vmul.f32 %v97, 2.0
    %v103 = vsub.f32 2.0, %v102
    %v104 = vmax.f32 %v103, 0.0
    %v105 = vsub.f32 0.5, %v104
    %v106 = vmax.f32 %v105, 0.0
    %v107 = vlaneseq
    %v108 = vshrl.u32 %v107, 7
    %v109 = vlaneseq
    %v110 = vand.u32 %v109, 127
    %vm111 = vcmp.eq.s32.totalorder %v108, %v110
    %p112 = scmp.eq.s32.totalorder 0, 0
    %s113 = scalar_select %p112, 1, 0
    %v114 = vstv %s113
    %vm115 = vcmp.eq.s32.totalorder %v114, 1
    %vm116 = vmand %vm115, %vm111
    %v117 = vsel %vm116, 0.0, %v106
    %v118 = vld [vmem:[#allocation2] sm:$0x1]
    %vm119 = vcmask 64512
    %v120 = vsel %vm119, %v117, -inf
    %121 = vmax.xlane.f32.xlu0 %v120
    %v122 = vpop.xlane.xlu0 %121
    %v124 = vlaneseq
    %v125 = vshrl.u32 %v124, 7
    %v126 = vsub.s32 0, %v125
    %v127 = vrot.slane %v122, %v126
    %v128 = vlaneseq
    %v129 = vshrl.u32 %v128, 7
    %v130 = vsub.s32 1, %v129
    %v131 = vrot.slane %v122, %v130
    %v132 = vlaneseq
    %v133 = vshrl.u32 %v132, 7
    %v134 = vsub.s32 2, %v133
    %v135 = vrot.slane %v122, %v134
    %v136 = vlaneseq
    %v137 = vshrl.u32 %v136, 7
    %v138 = vsub.s32 3, %v137
    %v139 = vrot.slane %v122, %v138
    %v140 = vlaneseq
    %v141 = vshrl.u32 %v140, 7
    %v142 = vsub.s32 4, %v141
    %v143 = vrot.slane %v122, %v142
    %v144 = vlaneseq
    %v145 = vshrl.u32 %v144, 7
    %v146 = vsub.s32 5, %v145
    %v147 = vrot.slane %v122, %v146
    %v148 = vlaneseq
    %v149 = vshrl.u32 %v148, 7
    %v150 = vsub.s32 6, %v149
    %v151 = vrot.slane %v122, %v150
    %v152 = vlaneseq
    %v153 = vshrl.u32 %v152, 7
    %v154 = vsub.s32 7, %v153
    %v155 = vrot.slane %v122, %v154
    %v156 = vcombine.low %v127, %v131
    %v157 = vcombine.low %v135, %v139
    %v158 = vcombine.low %v143, %v147
    %v159 = vcombine.low %v151, %v155
    %v161 = vunpack.c.l.s4 1966171168
    %v162 = vunpack.c.0.s8 %v161
    %v163 = vlaneseq
    %v164 = vshrl.u32 %v163, 7
    %v165 = vsub.s32 %v162, %v164
    %v166 = vrot.slane %v156, %v165
    %v168 = vunpack.c.l.s4 1966171168
    %v169 = vunpack.c.0.s8 %v168
    %v170 = vlaneseq
    %v171 = vshrl.u32 %v170, 7
    %v172 = vsub.s32 %v169, %v171
    %v173 = vrot.slane %v157, %v172
    %v175 = vunpack.c.l.s4 1966171168
    %v176 = vunpack.c.0.s8 %v175
    %v177 = vlaneseq
    %v178 = vshrl.u32 %v177, 7
    %v179 = vsub.s32 %v176, %v178
    %v180 = vrot.slane %v158, %v179
    %v182 = vunpack.c.l.s4 1966171168
    %v183 = vunpack.c.0.s8 %v182
    %v184 = vlaneseq
    %v185 = vshrl.u32 %v184, 7
    %v186 = vsub.s32 %v183, %v185
    %v187 = vrot.slane %v159, %v186
    %v188 = vcombine.low %v166, %v173
    %v189 = vcombine.low %v180, %v187
    %v191 = vunpack.c.l.s4 1966171168
    %v192 = vunpack.c.0.s8 %v191
    %v193 = vlaneseq
    %v194 = vshrl.u32 %v193, 7
    %v195 = vsub.s32 %v192, %v194
    %v196 = vrot.slane %v188, %v195
    %v198 = vunpack.c.l.s4 1966171168
    %v199 = vunpack.c.0.s8 %v198
    %v200 = vlaneseq
    %v201 = vshrl.u32 %v200, 7
    %v202 = vsub.s32 %v199, %v201
    %v203 = vrot.slane %v189, %v202
    %v204 = vcombine.low %v196, %v203
    %205 = vset.pattern.permute.xlu0 0
    %206 = vperm.xlu0 %205, %v204
    %v207 = vpop.permute.xlu0 %206
    %v208 = vlaneseq
    %v209 = vshrl.u32 %v208, 7
    %v210 = vsub.s32 %v110, %v209
    %v211 = vrot.slane %v207, %v210
    %v213 = vunpack.c.l.s4 1966171168
    %v214 = vunpack.c.0.s8 %v213
    %v215 = vlaneseq
    %v216 = vshrl.u32 %v215, 7
    %v217 = vsub.s32 %v214, %v216
    %v218 = vrot.slane %v211, %v217
    %v220 = vunpack.c.l.s4 1966171168
    %v221 = vunpack.c.0.s8 %v220
    %v222 = vlaneseq
    %v223 = vshrl.u32 %v222, 7
    %v224 = vsub.s32 %v221, %v223
    %v225 = vrot.slane %v218, %v224
    %v227 = vmax.f32 %v118, %v225
    %vm228 = vcmask 57344
    %229 = vst.msk [vmem:[#allocation2] sm:$0x1] %vm228, %v227
    // Predicated region
    $region22: #{tpu_custom_call.1} parent=1 // pred_check
      %p230 = pneg %p112
    $region23: #{tpu_custom_call.1} parent=1 // pred_check_branch
      %232 = sbr.rel (%p230) target = $region25
    $region24: #{tpu_custom_call.1} parent=1 // pred_region
      %v233 = vsub.f32 %v53, %v59
      %v234 = vmul.f32 %v233, %v233
      %235 = vadd.xlane.f32.xlu0 %v234
      %v236 = vpop.xlane.xlu0 %235
      %v238 = vlaneseq
      %v239 = vshrl.u32 %v238, 7
      %v240 = vsub.s32 %v110, %v239
      %v241 = vrot.slane %v236, %v240
      %243 = vst.msk [vmem:[#allocation8] sm:$0x1] %vm228, %v241
    $region25: #{tpu_custom_call.1} parent=1 // pred_fallthru
      _
    // Predicated region
    $region26: #{tpu_custom_call.1} parent=1 // pred_check
      %p244 = pneg %p40
    $region27: #{tpu_custom_call.1} parent=1 // pred_check_branch
      %246 = sbr.rel (%p244) target = $region29
    $region28: #{tpu_custom_call.1} parent=1 // pred_region
      %v247 = vld [vmem:[#allocation2] sm:$0x1]
      %248 = vst.msk [vmem:[#allocation9] sm:$0x1] %vm228, %v247
    $region29: #{tpu_custom_call.1} parent=1 // pred_fallthru
      _
    // Predicated region
    $region30: #{tpu_custom_call.1} parent=1 // pred_check
      _
    $region31: #{tpu_custom_call.1} parent=1 // pred_check_branch
      %250 = sbr.rel (0) target = $region33
    $region32: #{tpu_custom_call.1} parent=1 // pred_region
      %s252 = ssub.s32 16, 16
      %253 = vsyncadd [#allocation5], %s252
      %s255 = sshll.u32 [#allocation8], 4
      %s256 = int_to_ptr.vmem [resolvable:$true] %s255
      %258 = dma.vmem_to_hbm [thread:$0]  %s256, 16, %s2, [#allocation5]
    $region33: #{tpu_custom_call.1} parent=1 // pred_fallthru
      _
    // Predicated region
    $region34: #{tpu_custom_call.1} parent=1 // pred_check
      _
    $region35: #{tpu_custom_call.1} parent=1 // pred_check_branch
      %260 = sbr.rel (0) target = $region37
    $region36: #{tpu_custom_call.1} parent=1 // pred_region
      %s262 = ssub.s32 16, 16
      %263 = vsyncadd [#allocation10], %s262
      %s265 = sshll.u32 [#allocation9], 4
      %s266 = int_to_ptr.vmem [resolvable:$true] %s265
      %268 = dma.vmem_to_hbm [thread:$0]  %s266, 16, %s3, [#allocation10]
    $region37: #{tpu_custom_call.1} parent=1 // pred_fallthru
      _
    // Predicated region
    $region38: #{tpu_custom_call.1} parent=1 // pred_check
      _
    $region39: #{tpu_custom_call.1} parent=1 // pred_check_branch
      %270 = sbr.rel (0) target = $region41
    $region40: #{tpu_custom_call.1} parent=1 // pred_region
      %271 = dma.done [#allocation5], 16
    $region41: #{tpu_custom_call.1} parent=1 // pred_fallthru
      _
    // Predicated region
    $region42: #{tpu_custom_call.1} parent=1 // pred_check
      _
    $region43: #{tpu_custom_call.1} parent=1 // pred_check_branch
      %273 = sbr.rel (0) target = $region45
    $region44: #{tpu_custom_call.1} parent=1 // pred_region
      %274 = dma.done [#allocation10], 16
    $region45: #{tpu_custom_call.1} parent=1 // pred_fallthru
      _
    %275 = vsyncpa [#allocation4], 1
    %276 = vsyncpa [#allocation7], 1
    %277 = vsyncpa [#allocation5], 1
    %278 = vsyncpa [#allocation10], 1

</llo_original>
